<compile_context>
chip_gen: v6e
topology: v6e:2x2x1
jax: 0.10.0
libtpu: 0.0.40
codegen_flags: <defaults>
</compile_context>

<pallas_src>
import jax
import jax.numpy as jnp
from jax.experimental import pallas as pl
from jax.experimental.pallas import tpu as pltpu

_LANE = 128


def _round_up(x, m):
    return ((x + m - 1) // m) * m


def _choose_tiles(N, C_in, C_out, HW, *,
                  target_step_bytes=8 << 20,    # aim for multi-MB per grid step
                  vmem_tile_budget=24 << 20):   # double-buffered x+out tiles
    """Pick (nb, thw): batch-block count and lane-aligned spatial tile.

    Memory-bound kernel -> each grid step should move several MB so the
    ~0.35us per-step pipeline overhead is amortized, while the double-buffered
    x/out tiles stay well under the smallest VMEM (v7x: 64 MiB physical).
    """
    bpp = (C_in + C_out) * 4                    # bytes per pixel per image

    # Spatial tile: sized from the traffic target, lane-aligned, VMEM-capped.
    thw = _round_up(max(1, target_step_bytes // bpp), _LANE)
    max_thw_vmem = max(_LANE, (vmem_tile_budget // (2 * bpp)) // _LANE * _LANE)
    thw = min(thw, max_thw_vmem)

    if thw >= HW:
        # One image's spatial extent fits a single block (full extent is always
        # a legal block shape); block several batch images per step so small
        # images still amortize the fixed per-step cost.
        thw = HW
        per_img = max(1, bpp * HW)
        nb = min(N,
                 max(1, target_step_bytes // per_img),
                 max(1, vmem_tile_budget // (2 * per_img)))
        nb = max(1, nb)
    else:
        nb = 1
    return nb, thw


def _conv1x1_vpu_kernel(x_ref, w_ref, b_ref, o_ref):
    """Tiny-channel path: broadcast-FMA on the VPU; weights/bias scalars in SMEM."""
    # x_ref: (nb, C_in, thw) VMEM, w_ref: (C_out, C_in) SMEM, b_ref: (C_out,) SMEM
    _, c_in, _ = x_ref.shape
    c_out = o_ref.shape[1]
    x = x_ref[...]                              # load tile once (f32)
    for co in range(c_out):                     # static unroll: tiny channel counts
        acc = x[:, 0:1, :] * w_ref[co, 0] + b_ref[co]
        for ci in range(1, c_in):
            acc = acc + x[:, ci:ci + 1, :] * w_ref[co, ci]
        o_ref[:, co:co + 1, :] = acc.astype(o_ref.dtype)


def _conv1x1_mxu_kernel(x_ref, w_ref, b_ref, o_ref):
    """Large-channel path: MXU matmul per batched image."""
    # x_ref: (nb, C_in, thw) VMEM, w_ref: (C_out, C_in) VMEM, b_ref: (C_out, 1) VMEM
    nb = x_ref.shape[0]
    w = w_ref[...]
    b = b_ref[...]
    for bi in range(nb):                        # static unroll, nb is small
        acc = jnp.dot(w, x_ref[bi], preferred_element_type=jnp.float32)
        o_ref[bi] = (acc + b).astype(o_ref.dtype)


def outconv_forward(x_nchw, weight, bias, *,
                    target_step_bytes=8 << 20,
                    vmem_tile_budget=24 << 20):
    """1x1 conv forward, matching nn.Conv2d(in_ch, out_ch, 1).

    x_nchw: (N, C_in, H, W) float32
    weight: (C_out, C_in) or (C_out, C_in, 1, 1) float32
    bias:   (C_out,) float32
    returns (N, C_out, H, W) float32
    """
    N, C_in, H, W = x_nchw.shape
    if weight.ndim == 4:                        # torch layout (C_out, C_in, 1, 1)
        weight = weight.reshape(weight.shape[0], weight.shape[1])
    C_out = weight.shape[0]
    HW = H * W

    nb, thw = _choose_tiles(N, C_in, C_out, HW,
                            target_step_bytes=target_step_bytes,
                            vmem_tile_budget=vmem_tile_budget)
    grid = (pl.cdiv(N, nb), pl.cdiv(HW, thw))   # partial blocks are masked

    x_flat = x_nchw.reshape(N, C_in, HW)        # pure reshape, no data movement

    x_spec = pl.BlockSpec((nb, C_in, thw), lambda n, j: (n, 0, j))
    o_spec = pl.BlockSpec((nb, C_out, thw), lambda n, j: (n, 0, j))

    use_vpu = max(C_in, C_out) < 64             # tiny channel matmul -> VPU FMAs
    if use_vpu:
        kernel = _conv1x1_vpu_kernel
        w_arg, b_arg = weight, bias
        w_spec = pl.BlockSpec(memory_space=pltpu.MemorySpace.SMEM)
        b_spec = pl.BlockSpec(memory_space=pltpu.MemorySpace.SMEM)
    else:
        kernel = _conv1x1_mxu_kernel
        w_arg, b_arg = weight, bias.reshape(C_out, 1)
        w_spec = pl.BlockSpec((C_out, C_in), lambda n, j: (0, 0))
        b_spec = pl.BlockSpec((C_out, 1), lambda n, j: (0, 0))

    # Explicit VMEM limit: double-buffered x+out tiles plus headroom.  Needed on
    # v5e (16 MiB scoped default) once tiles are multi-MB; kept < 48 MiB so it
    # also fits v7x's 64 MiB physical VMEM.
    tile_bytes = 2 * nb * (C_in + C_out) * thw * 4
    vmem_limit = int(min(48 << 20, max(tile_bytes + (2 << 20), 16 << 20)))

    cost = pl.CostEstimate(
        flops=2 * N * HW * C_in * C_out,
        bytes_accessed=4 * (N * C_in * HW + N * C_out * HW + C_out * C_in + C_out),
        transcendentals=0,
    )

    out_flat = pl.pallas_call(
        kernel,
        out_shape=jax.ShapeDtypeStruct((N, C_out, HW), jnp.float32),
        grid_spec=pltpu.PrefetchScalarGridSpec(
            num_scalar_prefetch=0,
            grid=grid,
            in_specs=[x_spec, w_spec, b_spec],
            out_specs=o_spec,
        ),
        compiler_params=pltpu.CompilerParams(
            dimension_semantics=("parallel", "parallel"),
            vmem_limit_bytes=vmem_limit,
        ),
        cost_estimate=cost,
    )(x_flat, w_arg, b_arg)

    return out_flat.reshape(N, C_out, H, W)     # pure reshape, no transpose


def _reference(x, weight, bias):
    return jnp.einsum("nchw,oc->nohw", x, weight) + bias[None, :, None, None]


if __name__ == "__main__":
    key = jax.random.PRNGKey(0)

    # Test 1: shapes consistent with the module (batch=2, in_ch=4, 16x16, out_ch=3).
    # Tiny channels -> VPU path; whole image + batch-blocked in one step.
    k1, k2, k3, key = jax.random.split(key, 4)
    N, C_in, H, W, C_out = 2, 4, 16, 16, 3
    x = jax.random.normal(k1, (N, C_in, H, W), dtype=jnp.float32)
    w = jax.random.normal(k2, (C_out, C_in), dtype=jnp.float32) * 0.1
    b = jax.random.normal(k3, (C_out,), dtype=jnp.float32) * 0.1
    out = jax.block_until_ready(outconv_forward(x, w, b))
    assert out.shape == (N, C_out, H, W)
    assert jnp.allclose(out, _reference(x, w, b), atol=1e-5, rtol=1e-5)

    # Test 2: non-128-multiple H*W with a forced small tile -> exercises the
    # cdiv grid + masked partial last block.
    k1, k2, k3, key = jax.random.split(key, 4)
    N, C_in, H, W, C_out = 2, 4, 18, 18, 3
    x = jax.random.normal(k1, (N, C_in, H, W), dtype=jnp.float32)
    w = jax.random.normal(k2, (C_out, C_in), dtype=jnp.float32) * 0.1
    b = jax.random.normal(k3, (C_out,), dtype=jnp.float32) * 0.1
    out = jax.block_until_ready(outconv_forward(x, w, b, target_step_bytes=1))
    assert out.shape == (N, C_out, H, W)
    assert jnp.allclose(out, _reference(x, w, b), atol=1e-5, rtol=1e-5)

    # Test 3: larger channel counts -> MXU matmul path.
    k1, k2, k3, key = jax.random.split(key, 4)
    N, C_in, H, W, C_out = 2, 128, 8, 8, 64
    x = jax.random.normal(k1, (N, C_in, H, W), dtype=jnp.float32)
    w = jax.random.normal(k2, (C_out, C_in), dtype=jnp.float32) * 0.05
    b = jax.random.normal(k3, (C_out,), dtype=jnp.float32) * 0.1
    out = jax.block_until_ready(outconv_forward(x, w, b))
    assert out.shape == (N, C_out, H, W)
    assert jnp.allclose(out, _reference(x, w, b), atol=1e-4, rtol=1e-4)

    print("KERNEL_OK")
</pallas_src>

<mosaic_0001>
module attributes {stable_mosaic.version = 11 : i64} {
  func.func @_conv1x1_vpu_kernel(%arg0: i32, %arg1: i32, %arg2: memref<2x4x256xf32, #tpu.memory_space<vmem>>, %arg3: memref<3x4xf32, #tpu.memory_space<smem>>, %arg4: memref<3xf32, #tpu.memory_space<smem>>, %arg5: memref<2x3x256xf32, #tpu.memory_space<vmem>>) attributes {dimension_semantics = [#tpu.dimension_semantics<parallel>, #tpu.dimension_semantics<parallel>], iteration_bounds = array<i64: 1, 1>, scalar_prefetch = 0 : i64, scratch_operands = 0 : i64, tpu.core_type = #tpu.core_type<tc>, window_params = [{transform_indices = @transform_0, window_bounds = array<i64: 2, 4, 256>}, {transform_indices = @transform_1, window_bounds = array<i64: 3, 4>}, {transform_indices = @transform_2, window_bounds = array<i64: 3>}, {transform_indices = @transform_3, window_bounds = array<i64: 2, 3, 256>}]} {
    %c0 = arith.constant 0 : index
    %c0_0 = arith.constant 0 : index
    %c0_1 = arith.constant 0 : index
    %0 = vector.load %arg2[%c0, %c0_0, %c0_1] : memref<2x4x256xf32, #tpu.memory_space<vmem>>, vector<2x4x256xf32>
    %1 = vector.extract_strided_slice %0 {offsets = [0, 0, 0], sizes = [2, 1, 256], strides = [1, 1, 1]} : vector<2x4x256xf32> to vector<2x1x256xf32>
    %c0_2 = arith.constant 0 : index
    %c0_3 = arith.constant 0 : index
    %2 = memref.load %arg3[%c0_2, %c0_3] : memref<3x4xf32, #tpu.memory_space<smem>>
    %3 = vector.broadcast %2 : f32 to vector<2x1x256xf32>
    %4 = arith.mulf %1, %3 : vector<2x1x256xf32>
    %c0_4 = arith.constant 0 : index
    %5 = memref.load %arg4[%c0_4] : memref<3xf32, #tpu.memory_space<smem>>
    %6 = vector.broadcast %5 : f32 to vector<2x1x256xf32>
    %7 = arith.addf %4, %6 : vector<2x1x256xf32>
    %8 = vector.extract_strided_slice %0 {offsets = [0, 1, 0], sizes = [2, 1, 256], strides = [1, 1, 1]} : vector<2x4x256xf32> to vector<2x1x256xf32>
    %c0_5 = arith.constant 0 : index
    %c1 = arith.constant 1 : index
    %9 = memref.load %arg3[%c0_5, %c1] : memref<3x4xf32, #tpu.memory_space<smem>>
    %10 = vector.broadcast %9 : f32 to vector<2x1x256xf32>
    %11 = arith.mulf %8, %10 : vector<2x1x256xf32>
    %12 = arith.addf %7, %11 : vector<2x1x256xf32>
    %13 = vector.extract_strided_slice %0 {offsets = [0, 2, 0], sizes = [2, 1, 256], strides = [1, 1, 1]} : vector<2x4x256xf32> to vector<2x1x256xf32>
    %c0_6 = arith.constant 0 : index
    %c2 = arith.constant 2 : index
    %14 = memref.load %arg3[%c0_6, %c2] : memref<3x4xf32, #tpu.memory_space<smem>>
    %15 = vector.broadcast %14 : f32 to vector<2x1x256xf32>
    %16 = arith.mulf %13, %15 : vector<2x1x256xf32>
    %17 = arith.addf %12, %16 : vector<2x1x256xf32>
    %18 = vector.extract_strided_slice %0 {offsets = [0, 3, 0], sizes = [2, 1, 256], strides = [1, 1, 1]} : vector<2x4x256xf32> to vector<2x1x256xf32>
    %c0_7 = arith.constant 0 : index
    %c3 = arith.constant 3 : index
    %19 = memref.load %arg3[%c0_7, %c3] : memref<3x4xf32, #tpu.memory_space<smem>>
    %20 = vector.broadcast %19 : f32 to vector<2x1x256xf32>
    %21 = arith.mulf %18, %20 : vector<2x1x256xf32>
    %22 = arith.addf %17, %21 : vector<2x1x256xf32>
    %c0_8 = arith.constant 0 : index
    %c0_9 = arith.constant 0 : index
    %c0_10 = arith.constant 0 : index
    %23 = vector.load %arg5[%c0_8, %c0_9, %c0_10] : memref<2x3x256xf32, #tpu.memory_space<vmem>>, vector<2x1x256xf32>
    tpu.vector_store %arg5[%c0_8, %c0_9, %c0_10], %22 {strides = array<i32>} : memref<2x3x256xf32, #tpu.memory_space<vmem>>, vector<2x1x256xf32>,
    %24 = vector.extract_strided_slice %0 {offsets = [0, 0, 0], sizes = [2, 1, 256], strides = [1, 1, 1]} : vector<2x4x256xf32> to vector<2x1x256xf32>
    %c1_11 = arith.constant 1 : index
    %c0_12 = arith.constant 0 : index
    %25 = memref.load %arg3[%c1_11, %c0_12] : memref<3x4xf32, #tpu.memory_space<smem>>
    %26 = vector.broadcast %25 : f32 to vector<2x1x256xf32>
    %27 = arith.mulf %24, %26 : vector<2x1x256xf32>
    %c1_13 = arith.constant 1 : index
    %28 = memref.load %arg4[%c1_13] : memref<3xf32, #tpu.memory_space<smem>>
    %29 = vector.broadcast %28 : f32 to vector<2x1x256xf32>
    %30 = arith.addf %27, %29 : vector<2x1x256xf32>
    %31 = vector.extract_strided_slice %0 {offsets = [0, 1, 0], sizes = [2, 1, 256], strides = [1, 1, 1]} : vector<2x4x256xf32> to vector<2x1x256xf32>
    %c1_14 = arith.constant 1 : index
    %c1_15 = arith.constant 1 : index
    %32 = memref.load %arg3[%c1_14, %c1_15] : memref<3x4xf32, #tpu.memory_space<smem>>
    %33 = vector.broadcast %32 : f32 to vector<2x1x256xf32>
    %34 = arith.mulf %31, %33 : vector<2x1x256xf32>
    %35 = arith.addf %30, %34 : vector<2x1x256xf32>
    %36 = vector.extract_strided_slice %0 {offsets = [0, 2, 0], sizes = [2, 1, 256], strides = [1, 1, 1]} : vector<2x4x256xf32> to vector<2x1x256xf32>
    %c1_16 = arith.constant 1 : index
    %c2_17 = arith.constant 2 : index
    %37 = memref.load %arg3[%c1_16, %c2_17] : memref<3x4xf32, #tpu.memory_space<smem>>
    %38 = vector.broadcast %37 : f32 to vector<2x1x256xf32>
    %39 = arith.mulf %36, %38 : vector<2x1x256xf32>
    %40 = arith.addf %35, %39 : vector<2x1x256xf32>
    %41 = vector.extract_strided_slice %0 {offsets = [0, 3, 0], sizes = [2, 1, 256], strides = [1, 1, 1]} : vector<2x4x256xf32> to vector<2x1x256xf32>
    %c1_18 = arith.constant 1 : index
    %c3_19 = arith.constant 3 : index
    %42 = memref.load %arg3[%c1_18, %c3_19] : memref<3x4xf32, #tpu.memory_space<smem>>
    %43 = vector.broadcast %42 : f32 to vector<2x1x256xf32>
    %44 = arith.mulf %41, %43 : vector<2x1x256xf32>
    %45 = arith.addf %40, %44 : vector<2x1x256xf32>
    %c0_20 = arith.constant 0 : index
    %c1_21 = arith.constant 1 : index
    %c0_22 = arith.constant 0 : index
    %46 = vector.load %arg5[%c0_20, %c1_21, %c0_22] : memref<2x3x256xf32, #tpu.memory_space<vmem>>, vector<2x1x256xf32>
    tpu.vector_store %arg5[%c0_20, %c1_21, %c0_22], %45 {strides = array<i32>} : memref<2x3x256xf32, #tpu.memory_space<vmem>>, vector<2x1x256xf32>,
    %47 = vector.extract_strided_slice %0 {offsets = [0, 0, 0], sizes = [2, 1, 256], strides = [1, 1, 1]} : vector<2x4x256xf32> to vector<2x1x256xf32>
    %c2_23 = arith.constant 2 : index
    %c0_24 = arith.constant 0 : index
    %48 = memref.load %arg3[%c2_23, %c0_24] : memref<3x4xf32, #tpu.memory_space<smem>>
    %49 = vector.broadcast %48 : f32 to vector<2x1x256xf32>
    %50 = arith.mulf %47, %49 : vector<2x1x256xf32>
    %c2_25 = arith.constant 2 : index
    %51 = memref.load %arg4[%c2_25] : memref<3xf32, #tpu.memory_space<smem>>
    %52 = vector.broadcast %51 : f32 to vector<2x1x256xf32>
    %53 = arith.addf %50, %52 : vector<2x1x256xf32>
    %54 = vector.extract_strided_slice %0 {offsets = [0, 1, 0], sizes = [2, 1, 256], strides = [1, 1, 1]} : vector<2x4x256xf32> to vector<2x1x256xf32>
    %c2_26 = arith.constant 2 : index
    %c1_27 = arith.constant 1 : index
    %55 = memref.load %arg3[%c2_26, %c1_27] : memref<3x4xf32, #tpu.memory_space<smem>>
    %56 = vector.broadcast %55 : f32 to vector<2x1x256xf32>
    %57 = arith.mulf %54, %56 : vector<2x1x256xf32>
    %58 = arith.addf %53, %57 : vector<2x1x256xf32>
    %59 = vector.extract_strided_slice %0 {offsets = [0, 2, 0], sizes = [2, 1, 256], strides = [1, 1, 1]} : vector<2x4x256xf32> to vector<2x1x256xf32>
    %c2_28 = arith.constant 2 : index
    %c2_29 = arith.constant 2 : index
    %60 = memref.load %arg3[%c2_28, %c2_29] : memref<3x4xf32, #tpu.memory_space<smem>>
    %61 = vector.broadcast %60 : f32 to vector<2x1x256xf32>
    %62 = arith.mulf %59, %61 : vector<2x1x256xf32>
    %63 = arith.addf %58, %62 : vector<2x1x256xf32>
    %64 = vector.extract_strided_slice %0 {offsets = [0, 3, 0], sizes = [2, 1, 256], strides = [1, 1, 1]} : vector<2x4x256xf32> to vector<2x1x256xf32>
    %c2_30 = arith.constant 2 : index
    %c3_31 = arith.constant 3 : index
    %65 = memref.load %arg3[%c2_30, %c3_31] : memref<3x4xf32, #tpu.memory_space<smem>>
    %66 = vector.broadcast %65 : f32 to vector<2x1x256xf32>
    %67 = arith.mulf %64, %66 : vector<2x1x256xf32>
    %68 = arith.addf %63, %67 : vector<2x1x256xf32>
    %c0_32 = arith.constant 0 : index
    %c2_33 = arith.constant 2 : index
    %c0_34 = arith.constant 0 : index
    %69 = vector.load %arg5[%c0_32, %c2_33, %c0_34] : memref<2x3x256xf32, #tpu.memory_space<vmem>>, vector<2x1x256xf32>
    tpu.vector_store %arg5[%c0_32, %c2_33, %c0_34], %68 {strides = array<i32>} : memref<2x3x256xf32, #tpu.memory_space<vmem>>, vector<2x1x256xf32>,
    return
  }
  func.func @transform_0(%arg0: i32, %arg1: i32) -> (i32, i32, i32) {
    %c0_i32 = arith.constant 0 : i32
    %c0_i32_0 = arith.constant 0 : i32
    return %arg0, %c0_i32, %arg1 : i32, i32, i32
  }
  func.func @transform_1(%arg0: i32, %arg1: i32) -> (i32, i32) {
    %c0_i32 = arith.constant 0 : i32
    %c0_i32_0 = arith.constant 0 : i32
    %c0_i32_1 = arith.constant 0 : i32
    return %c0_i32, %c0_i32_0 : i32, i32
  }
  func.func @transform_2(%arg0: i32, %arg1: i32) -> i32 {
    %c0_i32 = arith.constant 0 : i32
    %c0_i32_0 = arith.constant 0 : i32
    return %c0_i32 : i32
  }
  func.func @transform_3(%arg0: i32, %arg1: i32) -> (i32, i32, i32) {
    %c0_i32 = arith.constant 0 : i32
    %c0_i32_0 = arith.constant 0 : i32
    return %arg0, %c0_i32, %arg1 : i32, i32, i32
  }
}

</mosaic_0001>

<llo_original>
// kernel: tpu_custom_call.1
$region0: #{tpu_custom_call.1}
  #allocation0 [shape = 'u32[]', space=smem, size = 0x4, offset = 0x4, fixed_abs, tag = 'smem constant byte address 0x4 - core index']
  #allocation1 [shape = 'u32[144,128]{1,0:T(1,128)}', space=vmem, size = 0x12000, scoped, tag = 'internal scratch']
  %s0 = inlined_call_operand.hbm [shape: f32[2,4,256], index: 0, kind: input, shape index: {}]
  %s1 = inlined_call_operand.hbm [shape: f32[3,4], index: 1, kind: input, shape index: {}]
  %s2 = inlined_call_operand.vmem [shape: f32[3], index: 2, kind: input, shape index: {}]
  %s3 = inlined_call_operand.vmem [shape: f32[2,3,256], index: 3, kind: output, shape index: {}]
  %s4 = sld [smem:[#allocation0]]
  $region34: #{tpu_custom_call.1} parent=0
    _
  %s6 = ssub.s32 1, %s4
  %s7 = scalar_select 0, %s6, %s4
  $region1: #{tpu_custom_call.1} parent=0
    #allocation2 [shape = 'u8[8192]{0}', space=vmem, size = 0x2000, scoped, tag = 'input window, operand 0, single buffered']
    #allocation3 [shape = 's32[1]{0}', space=sflag, size = 0x4, scoped, tag = 'scoped memory for tpu_custom_call.1']
    #allocation4 [shape = 's32[1]{0}', space=sflag, size = 0x4, scoped, tag = 'scoped memory for tpu_custom_call.1']
    #allocation5 [shape = 's32[1]{0}', space=sflag, size = 0x4, scoped, tag = 'scoped memory for tpu_custom_call.1']
    #allocation6 [shape = 'u8[2048]{0}', space=smem, size = 0x800, scoped, tag = 'input window, operand 1, single buffered']
    #allocation7 [shape = 'u8[512]{0}', space=smem, size = 0x200, scoped, tag = 'input window, operand 2, single buffered']
    %8 = vsyncpa [#allocation3], 0
    %9 = vsyncpa [#allocation4], 0
    %10 = vsyncpa [#allocation5], 0
    // Predicated region
    $region2: #{tpu_custom_call.1} parent=1 // pred_check
      _
    $region3: #{tpu_custom_call.1} parent=1 // pred_check_branch
      %12 = sbr.rel (0) target = $region5
    $region4: #{tpu_custom_call.1} parent=1 // pred_region
      %s14 = ssub.s32 256, 256
      %15 = vsyncadd [#allocation3], %s14
      %s16 = sshll.u32 [#allocation2], 4
      %s17 = int_to_ptr.vmem [resolvable:$true] %s16
      %22 = dma.hbm_to_vmem [thread:$0]  %s0, 256, %s17, [#allocation3], 128, 128, 8
    $region5: #{tpu_custom_call.1} parent=1 // pred_fallthru
      _
    // Predicated region
    $region6: #{tpu_custom_call.1} parent=1 // pred_check
      _
    $region7: #{tpu_custom_call.1} parent=1 // pred_check_branch
      %24 = sbr.rel (0) target = $region9
    $region8: #{tpu_custom_call.1} parent=1 // pred_region
      %s26 = ssub.s32 64, 64
      %27 = vsyncadd [#allocation4], %s26
      %30 = dma.hbm_to_smem %s1, 64, [#allocation6], [#allocation4]
    $region9: #{tpu_custom_call.1} parent=1 // pred_fallthru
      _
    // Predicated region
    $region10: #{tpu_custom_call.1} parent=1 // pred_check
      _
    $region11: #{tpu_custom_call.1} parent=1 // pred_check_branch
      %32 = sbr.rel (0) target = $region13
    $region12: #{tpu_custom_call.1} parent=1 // pred_region
      %s34 = ssub.s32 16, 16
      %35 = vsyncadd [#allocation5], %s34
      %s37 = sshll.u32 %s2, 4
      %s38 = int_to_ptr.vmem [resolvable:$true] %s37
      %40 = dma.vmem_to_smem %s38, 16, [#allocation7], [#allocation5]
    $region13: #{tpu_custom_call.1} parent=1 // pred_fallthru
      _
    // Predicated region
    $region14: #{tpu_custom_call.1} parent=1 // pred_check
      _
    $region15: #{tpu_custom_call.1} parent=1 // pred_check_branch
      %42 = sbr.rel (0) target = $region17
    $region16: #{tpu_custom_call.1} parent=1 // pred_region
      %43 = dma.done [#allocation3], 256
    $region17: #{tpu_custom_call.1} parent=1 // pred_fallthru
      _
    // Predicated region
    $region18: #{tpu_custom_call.1} parent=1 // pred_check
      _
    $region19: #{tpu_custom_call.1} parent=1 // pred_check_branch
      %45 = sbr.rel (0) target = $region21
    $region20: #{tpu_custom_call.1} parent=1 // pred_region
      %46 = dma.done [#allocation4], 64
    $region21: #{tpu_custom_call.1} parent=1 // pred_fallthru
      _
    // Predicated region
    $region22: #{tpu_custom_call.1} parent=1 // pred_check
      _
    $region23: #{tpu_custom_call.1} parent=1 // pred_check_branch
      %48 = sbr.rel (0) target = $region25
    $region24: #{tpu_custom_call.1} parent=1 // pred_region
      %49 = dma.done [#allocation5], 16
    $region25: #{tpu_custom_call.1} parent=1 // pred_fallthru
      _
    %50 = sfence
    %v51 = vld [vmem:[#allocation2] sm:$0xff]
    %v52 = vld [vmem:[#allocation2 + $0x8] sm:$0xff]
    %s53 = sld [smem:[#allocation6]]
    %v54 = vstv %s53
    %v55 = vmul.f32 %v51, %v54
    %v56 = vmul.f32 %v52, %v54
    %s57 = sld [smem:[#allocation7]]
    %v58 = vstv %s57
    %v59 = vadd.f32 %v55, %v58
    %v60 = vadd.f32 %v56, %v58
    %s61 = sld [smem:[#allocation6 + $0x1]]
    %v62 = vstv %s61
    %v63 = vmul.f32 %v51, %v62
    %v64 = vmul.f32 %v52, %v62
    %v67 = vrot.slane %v63, 5
    %v68 = vrot.slane %v67, 4
    %v69 = vrot.slane %v64, 5
    %v70 = vrot.slane %v69, 4
    %v73 = vadd.f32 %v59, %v68
    %v74 = vadd.f32 %v60, %v70
    %s75 = sld [smem:[#allocation6 + $0x2]]
    %v76 = vstv %s75
    %v77 = vmul.f32 %v51, %v76
    %v78 = vmul.f32 %v52, %v76
    %v81 = vrot.slane %v77, 6
    %v82 = vrot.slane %v81, 4
    %v83 = vrot.slane %v78, 6
    %v84 = vrot.slane %v83, 4
    %v87 = vadd.f32 %v73, %v82
    %v88 = vadd.f32 %v74, %v84
    %s89 = sld [smem:[#allocation6 + $0x3]]
    %v90 = vstv %s89
    %v91 = vmul.f32 %v51, %v90
    %v92 = vmul.f32 %v52, %v90
    %v95 = vrot.slane %v91, 7
    %v96 = vrot.slane %v95, 4
    %v97 = vrot.slane %v92, 7
    %v98 = vrot.slane %v97, 4
    %v101 = vadd.f32 %v87, %v96
    %v102 = vadd.f32 %v88, %v98
    %v106 = vunpack.c.l.s4 1966171168
    %v107 = vunpack.c.0.s8 %v106
    %v108 = vlaneseq
    %v109 = vshrl.u32 %v108, 7
    %v110 = vsub.s32 %v107, %v109
    %v111 = vrot.slane %v101, %v110
    %v113 = vunpack.c.l.s4 1966171168
    %v114 = vunpack.c.0.s8 %v113
    %v115 = vlaneseq
    %v116 = vshrl.u32 %v115, 7
    %v117 = vsub.s32 %v114, %v116
    %v118 = vrot.slane %v111, %v117
    %v120 = vunpack.c.l.s4 1966171168
    %v121 = vunpack.c.0.s8 %v120
    %v122 = vlaneseq
    %v123 = vshrl.u32 %v122, 7
    %v124 = vsub.s32 %v121, %v123
    %v125 = vrot.slane %v102, %v124
    %v127 = vunpack.c.l.s4 1966171168
    %v128 = vunpack.c.0.s8 %v127
    %v129 = vlaneseq
    %v130 = vshrl.u32 %v129, 7
    %v131 = vsub.s32 %v128, %v130
    %v132 = vrot.slane %v125, %v131
    %v135 = vlaneseq
    %vm136 = vcmp.ge.s32.totalorder %v135, 0
    %vm137 = vcmp.lt.s32.totalorder %v135, 256
    %vm138 = vmand %vm136, %vm137
    %139 = vst.msk [vmem:[%s3] ss:$4 sm:$0x3] %vm138, %v118
    %s140 = scalar_lea.vmem %s3, 8
    %141 = vst.msk [vmem:[%s140] ss:$4 sm:$0x3] %vm138, %v132
    %s142 = sld [smem:[#allocation6 + $0x80]]
    %v143 = vstv %s142
    %v144 = vmul.f32 %v51, %v143
    %v145 = vmul.f32 %v52, %v143
    %s146 = sld [smem:[#allocation7 + $0x1]]
    %v147 = vstv %s146
    %v148 = vadd.f32 %v144, %v147
    %v149 = vadd.f32 %v145, %v147
    %s150 = sld [smem:[#allocation6 + $0x81]]
    %v151 = vstv %s150
    %v152 = vmul.f32 %v51, %v151
    %v153 = vmul.f32 %v52, %v151
    %v156 = vrot.slane %v152, 5
    %v157 = vrot.slane %v156, 4
    %v158 = vrot.slane %v153, 5
    %v159 = vrot.slane %v158, 4
    %v162 = vadd.f32 %v148, %v157
    %v163 = vadd.f32 %v149, %v159
    %s164 = sld [smem:[#allocation6 + $0x82]]
    %v165 = vstv %s164
    %v166 = vmul.f32 %v51, %v165
    %v167 = vmul.f32 %v52, %v165
    %v170 = vrot.slane %v166, 6
    %v171 = vrot.slane %v170, 4
    %v172 = vrot.slane %v167, 6
    %v173 = vrot.slane %v172, 4
    %v176 = vadd.f32 %v162, %v171
    %v177 = vadd.f32 %v163, %v173
    %s178 = sld [smem:[#allocation6 + $0x83]]
    %v179 = vstv %s178
    %v180 = vmul.f32 %v51, %v179
    %v181 = vmul.f32 %v52, %v179
    %v184 = vrot.slane %v180, 7
    %v185 = vrot.slane %v184, 4
    %v186 = vrot.slane %v181, 7
    %v187 = vrot.slane %v186, 4
    %v190 = vadd.f32 %v176, %v185
    %v191 = vadd.f32 %v177, %v187
    %v195 = vunpack.c.l.s4 1966171168
    %v196 = vunpack.c.0.s8 %v195
    %v197 = vlaneseq
    %v198 = vshrl.u32 %v197, 7
    %v199 = vsub.s32 %v196, %v198
    %v200 = vrot.slane %v190, %v199
    %v202 = vunpack.c.l.s4 1966171168
    %v203 = vunpack.c.0.s8 %v202
    %v204 = vlaneseq
    %v205 = vshrl.u32 %v204, 7
    %v206 = vsub.s32 %v203, %v205
    %v207 = vrot.slane %v200, %v206
    %v209 = vunpack.c.l.s4 1966171168
    %v210 = vunpack.c.0.s8 %v209
    %v211 = vlaneseq
    %v212 = vshrl.u32 %v211, 7
    %v213 = vsub.s32 %v210, %v212
    %v214 = vrot.slane %v191, %v213
    %v216 = vunpack.c.l.s4 1966171168
    %v217 = vunpack.c.0.s8 %v216
    %v218 = vlaneseq
    %v219 = vshrl.u32 %v218, 7
    %v220 = vsub.s32 %v217, %v219
    %v221 = vrot.slane %v214, %v220
    %s224 = scalar_lea.vmem %s3, 1
    %225 = vst.msk [vmem:[%s224] ss:$4 sm:$0x3] %vm138, %v207
    %s226 = scalar_lea.vmem %s3, 9
    %227 = vst.msk [vmem:[%s226] ss:$4 sm:$0x3] %vm138, %v221
    %s228 = sld [smem:[#allocation6 + $0x100]]
    %v229 = vstv %s228
    %v230 = vmul.f32 %v51, %v229
    %v231 = vmul.f32 %v52, %v229
    %s232 = sld [smem:[#allocation7 + $0x2]]
    %v233 = vstv %s232
    %v234 = vadd.f32 %v230, %v233
    %v235 = vadd.f32 %v231, %v233
    %s236 = sld [smem:[#allocation6 + $0x101]]
    %v237 = vstv %s236
    %v238 = vmul.f32 %v51, %v237
    %v239 = vmul.f32 %v52, %v237
    %v242 = vrot.slane %v238, 5
    %v243 = vrot.slane %v242, 4
    %v244 = vrot.slane %v239, 5
    %v245 = vrot.slane %v244, 4
    %v248 = vadd.f32 %v234, %v243
    %v249 = vadd.f32 %v235, %v245
    %s250 = sld [smem:[#allocation6 + $0x102]]
    %v251 = vstv %s250
    %v252 = vmul.f32 %v51, %v251
    %v253 = vmul.f32 %v52, %v251
    %v256 = vrot.slane %v252, 6
    %v257 = vrot.slane %v256, 4
    %v258 = vrot.slane %v253, 6
    %v259 = vrot.slane %v258, 4
    %v262 = vadd.f32 %v248, %v257
    %v263 = vadd.f32 %v249, %v259
    %s264 = sld [smem:[#allocation6 + $0x103]]
    %v265 = vstv %s264
    %v266 = vmul.f32 %v51, %v265
    %v267 = vmul.f32 %v52, %v265
    %v270 = vrot.slane %v266, 7
    %v271 = vrot.slane %v270, 4
    %v272 = vrot.slane %v267, 7
    %v273 = vrot.slane %v272, 4
    %v276 = vadd.f32 %v262, %v271
    %v277 = vadd.f32 %v263, %v273
    %v281 = vunpack.c.l.s4 1966171168
    %v282 = vunpack.c.0.s8 %v281
    %v283 = vlaneseq
    %v284 = vshrl.u32 %v283, 7
    %v285 = vsub.s32 %v282, %v284
    %v286 = vrot.slane %v276, %v285
    %v288 = vunpack.c.l.s4 1966171168
    %v289 = vunpack.c.0.s8 %v288
    %v290 = vlaneseq
    %v291 = vshrl.u32 %v290, 7
    %v292 = vsub.s32 %v289, %v291
    %v293 = vrot.slane %v286, %v292
    %v295 = vunpack.c.l.s4 1966171168
    %v296 = vunpack.c.0.s8 %v295
    %v297 = vlaneseq
    %v298 = vshrl.u32 %v297, 7
    %v299 = vsub.s32 %v296, %v298
    %v300 = vrot.slane %v277, %v299
    %v302 = vunpack.c.l.s4 1966171168
    %v303 = vunpack.c.0.s8 %v302
    %v304 = vlaneseq
    %v305 = vshrl.u32 %v304, 7
    %v306 = vsub.s32 %v303, %v305
    %v307 = vrot.slane %v300, %v306
    %s310 = scalar_lea.vmem %s3, 2
    %311 = vst.msk [vmem:[%s310] ss:$4 sm:$0x3] %vm138, %v293
    %s312 = scalar_lea.vmem %s3, 10
    %313 = vst.msk [vmem:[%s312] ss:$4 sm:$0x3] %vm138, %v307
    // Predicated region
    $region26: #{tpu_custom_call.1} parent=1 // pred_check
      _
    $region27: #{tpu_custom_call.1} parent=1 // pred_check_branch
      %315 = sbr.rel (0) target = $region29
    $region28: #{tpu_custom_call.1} parent=1 // pred_region
      _
    $region29: #{tpu_custom_call.1} parent=1 // pred_fallthru
      _
    // Predicated region
    $region30: #{tpu_custom_call.1} parent=1 // pred_check
      _
    $region31: #{tpu_custom_call.1} parent=1 // pred_check_branch
      %317 = sbr.rel (0) target = $region33
    $region32: #{tpu_custom_call.1} parent=1 // pred_region
      _
    $region33: #{tpu_custom_call.1} parent=1 // pred_fallthru
      _
    %318 = vsyncpa [#allocation3], 1
    %319 = vsyncpa [#allocation4], 1
    %320 = vsyncpa [#allocation5], 1

</llo_original>
